<compile_context>
chip_gen: v7x
topology: tpu7x:2x2x1
jax: 0.10.0
libtpu: 0.0.40
codegen_flags: <defaults>
</compile_context>

<pallas_src>
import jax
import jax.numpy as jnp
from jax import lax
from jax.experimental import pallas as pl
from jax.experimental.pallas import tpu as pltpu


def _normalize_kernel(x_ref, o_ref, *, m0, sqrt_var0, eps):
    # x_ref, o_ref: (TN, D) blocks resident in VMEM.
    x = x_ref[...].astype(jnp.float32)                       # (TN, D)
    d = x.shape[-1]

    # Per-row (per-sample) mean over the lane-dense reduction axis.
    mean = jnp.mean(x, axis=-1, keepdims=True)               # (TN, 1)
    diff = x - mean                                          # (TN, D)

    # Unbiased variance (torch.var default: correction=1).
    var = jnp.sum(diff * diff, axis=-1, keepdims=True) * jnp.float32(1.0 / (d - 1))

    # One rsqrt per row (EUP work is O(N), not O(N*D)).
    scale = jnp.float32(sqrt_var0) * lax.rsqrt(jnp.maximum(var, jnp.float32(eps)))

    # out = m0 + sign(diff) * sqrt(var0/var_c)*|diff| == m0 + scale*diff
    # (covers the diff == 0 case identically: both give m0).
    o_ref[...] = (jnp.float32(m0) + scale * diff).astype(o_ref.dtype)


def normalize_module(x, m0, var0, eps=1e-6):
    """Pallas implementation of NormalizeModule.forward for NCHW input x."""
    n, c, h, w = x.shape
    d = c * h * w
    x2d = x.reshape(n, d)

    # --- Tile over N -------------------------------------------------------
    # Keep D whole in the block (reduction stays local, output lane-dense).
    # Pick TN sublane-aligned (multiple of 8 for f32) and ~2-4 MiB per tile so
    # in+out double-buffering fits comfortably even in v7x's 64 MiB VMEM.
    bytes_per_row = d * 4  # f32 compute
    target_tile_bytes = 4 * 1024 * 1024
    if n <= 8:
        tn = n  # block equals full array dim -> always a legal block shape
    else:
        rows = max(8, (target_tile_bytes // max(bytes_per_row, 1)) // 8 * 8)
        tn = n if rows >= n else rows
    grid = (pl.cdiv(n, tn),)

    kernel = lambda xr, orf: _normalize_kernel(
        xr, orf, m0=float(m0), sqrt_var0=float(var0) ** 0.5, eps=float(eps)
    )

    out2d = pl.pallas_call(
        kernel,
        out_shape=jax.ShapeDtypeStruct((n, d), x.dtype),
        grid_spec=pltpu.PrefetchScalarGridSpec(
            num_scalar_prefetch=0,
            grid=grid,
            in_specs=[pl.BlockSpec((tn, d), lambda i: (i, 0))],
            out_specs=pl.BlockSpec((tn, d), lambda i: (i, 0)),
        ),
        compiler_params=pltpu.CompilerParams(
            dimension_semantics=("parallel",),
        ),
        cost_estimate=pl.CostEstimate(
            flops=5 * n * d,            # mean, diff, diff^2 sum, scale*diff, +m0
            transcendentals=n,          # one rsqrt per row
            bytes_accessed=2 * n * d * x.dtype.itemsize,
        ),
    )(x2d)

    return out2d.reshape(n, c, h, w)


def _reference(x, m0, var0, eps=1e-6):
    # Pure-JAX reference mirroring the PyTorch forward exactly.
    x = x.astype(jnp.float32)
    x_m = jnp.mean(x, axis=(1, 2, 3), keepdims=True)
    n_red = x.shape[1] * x.shape[2] * x.shape[3]
    x_var = jnp.sum((x - x_m) ** 2, axis=(1, 2, 3), keepdims=True) / (n_red - 1)
    y = jnp.sqrt(var0 * (x - x_m) ** 2 / jnp.maximum(x_var, eps))
    return jnp.where(x > x_m, m0 + y, m0 - y)


if __name__ == "__main__":
    # Module hyper-parameters (constructor args), chosen deterministically.
    m0, var0, eps = 0.5, 1.0, 1e-6

    key = jax.random.PRNGKey(0)
    x = jax.random.normal(key, (2, 4, 16, 16), dtype=jnp.float32)

    out = normalize_module(x, m0, var0, eps)
    out = jax.block_until_ready(out)

    ref = _reference(x, m0, var0, eps)
    assert out.shape == x.shape and out.dtype == x.dtype
    assert jnp.allclose(out, ref, atol=1e-5, rtol=1e-5)

    print("KERNEL_OK")
</pallas_src>

<mosaic_0001>
module attributes {stable_mosaic.version = 11 : i64} {
  func.func @_lambda_(%arg0: i32, %arg1: memref<2x1024xf32, #tpu.memory_space<vmem>>, %arg2: memref<2x1024xf32, #tpu.memory_space<vmem>>) attributes {dimension_semantics = [#tpu.dimension_semantics<parallel>], iteration_bounds = array<i64: 1>, scalar_prefetch = 0 : i64, scratch_operands = 0 : i64, tpu.core_type = #tpu.core_type<tc>, window_params = [{transform_indices = @transform_0, window_bounds = array<i64: 2, 1024>}, {transform_indices = @transform_1, window_bounds = array<i64: 2, 1024>}]} {
    %c0 = arith.constant 0 : index
    %c0_0 = arith.constant 0 : index
    %0 = vector.load %arg1[%c0, %c0_0] : memref<2x1024xf32, #tpu.memory_space<vmem>>, vector<2x1024xf32>
    %cst = arith.constant dense<0.000000e+00> : vector<2xf32>
    %1 = vector.multi_reduction <add>, %0, %cst [1] : vector<2x1024xf32> to vector<2xf32>
    %2 = vector.shape_cast %1 : vector<2xf32> to vector<2x1xf32>
    %cst_1 = arith.constant 1.024000e+03 : f32
    %3 = vector.broadcast %cst_1 : f32 to vector<2x1xf32>
    %4 = arith.divf %2, %3 : vector<2x1xf32>
    %5 = vector.broadcast %4 : vector<2x1xf32> to vector<2x1024xf32>
    %6 = arith.subf %0, %5 : vector<2x1024xf32>
    %7 = arith.mulf %6, %6 : vector<2x1024xf32>
    %cst_2 = arith.constant dense<0.000000e+00> : vector<2xf32>
    %8 = vector.multi_reduction <add>, %7, %cst_2 [1] : vector<2x1024xf32> to vector<2xf32>
    %9 = vector.shape_cast %8 : vector<2xf32> to vector<2x1xf32>
    %cst_3 = arith.constant 9.77517105E-4 : f32
    %10 = vector.broadcast %cst_3 : f32 to vector<2x1xf32>
    %11 = arith.mulf %9, %10 : vector<2x1xf32>
    %cst_4 = arith.constant 9.99999997E-7 : f32
    %12 = vector.broadcast %cst_4 : f32 to vector<2x1xf32>
    %13 = arith.maximumf %11, %12 : vector<2x1xf32>
    %14 = math.rsqrt %13 : vector<2x1xf32>
    %cst_5 = arith.constant 1.000000e+00 : f32
    %15 = vector.broadcast %cst_5 : f32 to vector<2x1xf32>
    %16 = arith.mulf %15, %14 : vector<2x1xf32>
    %17 = vector.broadcast %16 : vector<2x1xf32> to vector<2x1024xf32>
    %18 = arith.mulf %17, %6 : vector<2x1024xf32>
    %cst_6 = arith.constant 5.000000e-01 : f32
    %19 = vector.broadcast %cst_6 : f32 to vector<2x1024xf32>
    %20 = arith.addf %19, %18 : vector<2x1024xf32>
    %c0_7 = arith.constant 0 : index
    %c0_8 = arith.constant 0 : index
    %21 = vector.load %arg2[%c0_7, %c0_8] : memref<2x1024xf32, #tpu.memory_space<vmem>>, vector<2x1024xf32>
    tpu.vector_store %arg2[%c0_7, %c0_8], %20 {strides = array<i32>} : memref<2x1024xf32, #tpu.memory_space<vmem>>, vector<2x1024xf32>,
    return
  }
  func.func @transform_0(%arg0: i32) -> (i32, i32) {
    %c0_i32 = arith.constant 0 : i32
    %c0_i32_0 = arith.constant 0 : i32
    return %arg0, %c0_i32 : i32, i32
  }
  func.func @transform_1(%arg0: i32) -> (i32, i32) {
    %c0_i32 = arith.constant 0 : i32
    %c0_i32_0 = arith.constant 0 : i32
    return %arg0, %c0_i32 : i32, i32
  }
}

</mosaic_0001>

<llo_original>
// kernel: tpu_custom_call.1
$region0: #{tpu_custom_call.1}
  #allocation0 [shape = 'u32[]', space=smem, size = 0x4, offset = 0x4, fixed_abs, tag = 'smem constant byte address 0x4 - core index']
  #allocation1 [shape = 'u32[144,128]{1,0:T(1,128)}', space=vmem, size = 0x12000, scoped, tag = 'internal scratch']
  %s0 = inlined_call_operand.hbm [shape: f32[2,1024], index: 0, kind: input, shape index: {}]
  %s1 = inlined_call_operand.hbm [shape: f32[2,1024], index: 1, kind: output, shape index: {}]
  %s2 = sld [smem:[#allocation0]]
  $region18: #{tpu_custom_call.1} parent=0
    _
  %s4 = ssub.s32 1, %s2
  %s5 = scalar_select 0, %s4, %s2
  $region1: #{tpu_custom_call.1} parent=0
    #allocation2 [shape = 'u8[8192]{0}', space=vmem, size = 0x2000, scoped, tag = 'input window, operand 0, single buffered']
    #allocation3 [shape = 's32[1]{0}', space=sflag, size = 0x4, scoped, tag = 'scoped memory for tpu_custom_call.1']
    #allocation4 [shape = 's32[1]{0}', space=sflag, size = 0x4, scoped, tag = 'scoped memory for tpu_custom_call.1']
    #allocation5 [shape = 'u8[8192]{0}', space=vmem, size = 0x2000, scoped, tag = 'output window, operand 0, single buffered']
    %6 = vsyncpa [#allocation3], 0
    %7 = vsyncpa [#allocation4], 0
    // Predicated region
    $region2: #{tpu_custom_call.1} parent=1 // pred_check
      _
    $region3: #{tpu_custom_call.1} parent=1 // pred_check_branch
      %9 = sbr.rel (0) target = $region5
    $region4: #{tpu_custom_call.1} parent=1 // pred_region
      %s11 = ssub.s32 256, 256
      %12 = vsyncadd [#allocation3], %s11
      %s14 = sshll.u32 [#allocation2], 4
      %s15 = int_to_ptr.vmem [resolvable:$true] %s14
      %17 = dma.hbm_to_vmem [thread:$0]  %s0, 256, %s15, [#allocation3]
    $region5: #{tpu_custom_call.1} parent=1 // pred_fallthru
      _
    // Predicated region
    $region6: #{tpu_custom_call.1} parent=1 // pred_check
      _
    $region7: #{tpu_custom_call.1} parent=1 // pred_check_branch
      %19 = sbr.rel (0) target = $region9
    $region8: #{tpu_custom_call.1} parent=1 // pred_region
      %20 = dma.done [#allocation3], 256
    $region9: #{tpu_custom_call.1} parent=1 // pred_fallthru
      _
    %v21 = vld [vmem:[#allocation2] sm:$0xff]
    %v22 = vld [vmem:[#allocation2 + $0x8] sm:$0xff]
    %v25 = vcombine.high %v21, %v21
    %v27 = vunpack.c.l.s4 1983009808
    %v28 = vunpack.c.0.s8 %v27
    %v29 = vlaneseq
    %v30 = vshrl.u32 %v29, 7
    %v31 = vsub.s32 %v28, %v30
    %v32 = vrot.slane %v21, %v31
    %v34 = vunpack.c.l.s4 1983009808
    %v35 = vunpack.c.0.s8 %v34
    %v36 = vlaneseq
    %v37 = vshrl.u32 %v36, 7
    %v38 = vsub.s32 %v35, %v37
    %v39 = vrot.slane %v25, %v38
    %v40 = vcombine.high %v32, %v32
    %v41 = vcombine.high %v39, %v39
    %v42 = vcombine.high %v22, %v22
    %v44 = vunpack.c.l.s4 1983009808
    %v45 = vunpack.c.0.s8 %v44
    %v46 = vlaneseq
    %v47 = vshrl.u32 %v46, 7
    %v48 = vsub.s32 %v45, %v47
    %v49 = vrot.slane %v22, %v48
    %v51 = vunpack.c.l.s4 1983009808
    %v52 = vunpack.c.0.s8 %v51
    %v53 = vlaneseq
    %v54 = vshrl.u32 %v53, 7
    %v55 = vsub.s32 %v52, %v54
    %v56 = vrot.slane %v42, %v55
    %v57 = vcombine.high %v49, %v49
    %v58 = vcombine.high %v56, %v56
    %vm67 = vcmask 1041408
    %v68 = vsel %vm67, %v32, 0.0
    %v69 = vsel %vm67, %v40, 0.0
    %v70 = vadd.f32 %v68, %v69
    %v71 = vsel %vm67, %v39, 0.0
    %v72 = vadd.f32 %v70, %v71
    %v73 = vsel %vm67, %v41, 0.0
    %v74 = vadd.f32 %v72, %v73
    %v75 = vsel %vm67, %v49, 0.0
    %v76 = vadd.f32 %v74, %v75
    %v77 = vsel %vm67, %v57, 0.0
    %v78 = vadd.f32 %v76, %v77
    %v79 = vsel %vm67, %v56, 0.0
    %v80 = vadd.f32 %v78, %v79
    %v81 = vsel %vm67, %v58, 0.0
    %v82 = vadd.f32 %v80, %v81
    %83 = vadd.xlane.f32.xlu0 %v82
    %v84 = vpop.xlane.xlu0 %83
    %v85 = vrcp.pop 1024.0
    %v86 = vmul.f32 %v84, %v85
    %v89 = vunpack.c.l.s4 269488144
    %v90 = vunpack.c.0.s8 %v89
    %v91 = vlaneseq
    %v92 = vshrl.u32 %v91, 7
    %v93 = vsub.s32 %v90, %v92
    %v94 = vrot.slane %v86, %v93
    %v96 = vsub.f32 %v21, %v94
    %v97 = vsub.f32 %v22, %v94
    %v98 = vmul.f32 %v96, %v96
    %v99 = vmul.f32 %v97, %v97
    %v102 = vcombine.high %v98, %v98
    %v104 = vunpack.c.l.s4 1983009808
    %v105 = vunpack.c.0.s8 %v104
    %v106 = vlaneseq
    %v107 = vshrl.u32 %v106, 7
    %v108 = vsub.s32 %v105, %v107
    %v109 = vrot.slane %v98, %v108
    %v111 = vunpack.c.l.s4 1983009808
    %v112 = vunpack.c.0.s8 %v111
    %v113 = vlaneseq
    %v114 = vshrl.u32 %v113, 7
    %v115 = vsub.s32 %v112, %v114
    %v116 = vrot.slane %v102, %v115
    %v117 = vcombine.high %v109, %v109
    %v118 = vcombine.high %v116, %v116
    %v119 = vcombine.high %v99, %v99
    %v121 = vunpack.c.l.s4 1983009808
    %v122 = vunpack.c.0.s8 %v121
    %v123 = vlaneseq
    %v124 = vshrl.u32 %v123, 7
    %v125 = vsub.s32 %v122, %v124
    %v126 = vrot.slane %v99, %v125
    %v128 = vunpack.c.l.s4 1983009808
    %v129 = vunpack.c.0.s8 %v128
    %v130 = vlaneseq
    %v131 = vshrl.u32 %v130, 7
    %v132 = vsub.s32 %v129, %v131
    %v133 = vrot.slane %v119, %v132
    %v134 = vcombine.high %v126, %v126
    %v135 = vcombine.high %v133, %v133
    %v144 = vsel %vm67, %v109, 0.0
    %v145 = vsel %vm67, %v117, 0.0
    %v146 = vadd.f32 %v144, %v145
    %v147 = vsel %vm67, %v116, 0.0
    %v148 = vadd.f32 %v146, %v147
    %v149 = vsel %vm67, %v118, 0.0
    %v150 = vadd.f32 %v148, %v149
    %v151 = vsel %vm67, %v126, 0.0
    %v152 = vadd.f32 %v150, %v151
    %v153 = vsel %vm67, %v134, 0.0
    %v154 = vadd.f32 %v152, %v153
    %v155 = vsel %vm67, %v133, 0.0
    %v156 = vadd.f32 %v154, %v155
    %v157 = vsel %vm67, %v135, 0.0
    %v158 = vadd.f32 %v156, %v157
    %159 = vadd.xlane.f32.xlu0 %v158
    %v160 = vpop.xlane.xlu0 %159
    %v161 = vmul.f32 %v160, 0.0009775171
    %v162 = vmax.f32 %v161, 1e-06
    %v163 = vrsqrt.pop %v162
    %v166 = vcombine.high %v96, %v96
    %v168 = vunpack.c.l.s4 1983009808
    %v169 = vunpack.c.0.s8 %v168
    %v170 = vlaneseq
    %v171 = vshrl.u32 %v170, 7
    %v172 = vsub.s32 %v169, %v171
    %v173 = vrot.slane %v96, %v172
    %v175 = vunpack.c.l.s4 1983009808
    %v176 = vunpack.c.0.s8 %v175
    %v177 = vlaneseq
    %v178 = vshrl.u32 %v177, 7
    %v179 = vsub.s32 %v176, %v178
    %v180 = vrot.slane %v166, %v179
    %v181 = vcombine.high %v173, %v173
    %v182 = vcombine.high %v180, %v180
    %v183 = vcombine.high %v97, %v97
    %v185 = vunpack.c.l.s4 1983009808
    %v186 = vunpack.c.0.s8 %v185
    %v187 = vlaneseq
    %v188 = vshrl.u32 %v187, 7
    %v189 = vsub.s32 %v186, %v188
    %v190 = vrot.slane %v97, %v189
    %v192 = vunpack.c.l.s4 1983009808
    %v193 = vunpack.c.0.s8 %v192
    %v194 = vlaneseq
    %v195 = vshrl.u32 %v194, 7
    %v196 = vsub.s32 %v193, %v195
    %v197 = vrot.slane %v183, %v196
    %v198 = vcombine.high %v190, %v190
    %v199 = vcombine.high %v197, %v197
    %v208 = vmul.f32 %v163, %v173
    %v209 = vmul.f32 %v163, %v181
    %v210 = vmul.f32 %v163, %v180
    %v211 = vmul.f32 %v163, %v182
    %v212 = vmul.f32 %v163, %v190
    %v213 = vmul.f32 %v163, %v198
    %v214 = vmul.f32 %v163, %v197
    %v215 = vmul.f32 %v163, %v199
    %v216 = vadd.f32 %v208, 0.5
    %v217 = vadd.f32 %v209, 0.5
    %v218 = vadd.f32 %v210, 0.5
    %v219 = vadd.f32 %v211, 0.5
    %v220 = vadd.f32 %v212, 0.5
    %v221 = vadd.f32 %v213, 0.5
    %v222 = vadd.f32 %v214, 0.5
    %v223 = vadd.f32 %v215, 0.5
    %v232 = vcombine.low %v216, %v217
    %v233 = vcombine.low %v218, %v219
    %v235 = vunpack.c.l.s4 1983009808
    %v236 = vunpack.c.0.s8 %v235
    %v237 = vlaneseq
    %v238 = vshrl.u32 %v237, 7
    %v239 = vsub.s32 %v236, %v238
    %v240 = vrot.slane %v232, %v239
    %v242 = vunpack.c.l.s4 1983009808
    %v243 = vunpack.c.0.s8 %v242
    %v244 = vlaneseq
    %v245 = vshrl.u32 %v244, 7
    %v246 = vsub.s32 %v243, %v245
    %v247 = vrot.slane %v233, %v246
    %v248 = vcombine.low %v240, %v247
    %v249 = vcombine.low %v220, %v221
    %v250 = vcombine.low %v222, %v223
    %v252 = vunpack.c.l.s4 1983009808
    %v253 = vunpack.c.0.s8 %v252
    %v254 = vlaneseq
    %v255 = vshrl.u32 %v254, 7
    %v256 = vsub.s32 %v253, %v255
    %v257 = vrot.slane %v249, %v256
    %v259 = vunpack.c.l.s4 1983009808
    %v260 = vunpack.c.0.s8 %v259
    %v261 = vlaneseq
    %v262 = vshrl.u32 %v261, 7
    %v263 = vsub.s32 %v260, %v262
    %v264 = vrot.slane %v250, %v263
    %v265 = vcombine.low %v257, %v264
    %268 = vst [vmem:[#allocation5] sm:$0xff] %v248
    %269 = vst [vmem:[#allocation5 + $0x8] sm:$0xff] %v265
    // Predicated region
    $region10: #{tpu_custom_call.1} parent=1 // pred_check
      _
    $region11: #{tpu_custom_call.1} parent=1 // pred_check_branch
      %271 = sbr.rel (0) target = $region13
    $region12: #{tpu_custom_call.1} parent=1 // pred_region
      %s273 = ssub.s32 256, 256
      %274 = vsyncadd [#allocation4], %s273
      %s276 = sshll.u32 [#allocation5], 4
      %s277 = int_to_ptr.vmem [resolvable:$true] %s276
      %279 = dma.vmem_to_hbm [thread:$0]  %s277, 256, %s1, [#allocation4]
    $region13: #{tpu_custom_call.1} parent=1 // pred_fallthru
      _
    // Predicated region
    $region14: #{tpu_custom_call.1} parent=1 // pred_check
      _
    $region15: #{tpu_custom_call.1} parent=1 // pred_check_branch
      %281 = sbr.rel (0) target = $region17
    $region16: #{tpu_custom_call.1} parent=1 // pred_region
      %282 = dma.done [#allocation4], 256
    $region17: #{tpu_custom_call.1} parent=1 // pred_fallthru
      _
    %283 = vsyncpa [#allocation3], 1
    %284 = vsyncpa [#allocation4], 1

</llo_original>
